<compile_context>
chip_gen: v7x
topology: tpu7x:2x2x1
jax: 0.10.0
libtpu: 0.0.40
codegen_flags: <defaults>
</compile_context>

<pallas_src>
import jax
import jax.numpy as jnp
from jax.experimental import pallas as pl
from jax.experimental.pallas import tpu as pltpu

LANE = 128


def _round_up(n, m):
    return ((n + m - 1) // m) * m


def _fclayer_kernel(x_ref, w1t_ref, w2t_ref, o_ref):
    # x_ref:   (TB, c_pad)      batch rows on sublanes, channels on lanes
    # w1t_ref: (c_pad, hidden)  = W1.T  (pre-transposed once in prepare)
    # w2t_ref: (hidden, c_pad)  = W2.T  (pre-transposed once in prepare)
    x = x_ref[...]
    h = jnp.dot(x, w1t_ref[...], preferred_element_type=jnp.float32)
    h = jnp.maximum(h, 0.0)
    # astype is a no-op for f32 weights; only matters for optional bf16 weights.
    y = jnp.dot(h.astype(w2t_ref.dtype), w2t_ref[...],
                preferred_element_type=jnp.float32)
    y = jnp.maximum(y, 0.0)
    o_ref[...] = y.astype(o_ref.dtype)


def _vmem_limit_bytes():
    """Generation-aware scoped-VMEM limit (leaves headroom below physical)."""
    try:
        cap = int(pltpu.get_tpu_info().vmem_capacity_bytes)
    except Exception:
        cap = 64 * 1024 * 1024  # conservative: v7x per-TC VMEM
    # 128 MiB (v5e/v6e) -> ~102 MiB;  64 MiB (v7x) -> 48 MiB.
    return max(min(int(cap * 0.8), cap - (16 << 20)), 16 << 20)


def _pick_batch_tile(B, c_pad, hidden, itemsize, vmem_limit,
                     target_block_bytes=4 << 20, max_tile=8192):
    """Largest dtype-aligned batch tile that (a) targets ~4 MiB x-blocks,
    (b) fits the double-buffered x/out + single-buffered weights in VMEM,
    (c) leaves >=2 grid steps when the batch allows (v7x megacore)."""
    sub = max(8, 32 // itemsize)              # 8 f32, 16 bf16, 32 int8/fp8
    budget = int(vmem_limit * 0.75)           # headroom for compiler scratch
    weight_bytes = 2 * c_pad * hidden * itemsize   # Buffered(1) each
    act_budget = max(budget - weight_bytes, 4 * sub * c_pad * itemsize)
    tb_vmem = act_budget // (4 * c_pad * itemsize)  # x + out, double-buffered
    tb_target = max(target_block_bytes // (c_pad * itemsize), sub)
    tb = min(max_tile, tb_vmem, tb_target)
    if B >= 2 * sub:                           # keep >=2 grid steps
        tb = min(tb, -(-B // 2))
    tb = min(tb, _round_up(B, sub))            # never exceed the (padded) batch
    return max(sub, (tb // sub) * sub)


def prepare_fclayer_params(w1, w2):
    """One-time parameter prep (call at init, NOT per forward).

    w1: (hidden, c_in), w2: (c_in, hidden)  -- PyTorch Linear.weight layout.
    Returns (w1t, w2t) pre-transposed and lane-padded to a 128-multiple c_in
    so every kernel store is an unmasked full-lane vst.
    """
    hidden, c_in = w1.shape
    assert w2.shape == (c_in, hidden)
    c_pad = _round_up(c_in, LANE)
    w1t = jnp.transpose(w1)   # (c_in, hidden)
    w2t = jnp.transpose(w2)   # (hidden, c_in)
    if c_pad != c_in:
        w1t = jnp.pad(w1t, ((0, c_pad - c_in), (0, 0)))
        w2t = jnp.pad(w2t, ((0, 0), (0, c_pad - c_in)))
    return w1t, w2t


def fclayer_forward(x, w1t, w2t):
    """x: (..., c_in); (w1t, w2t) from prepare_fclayer_params.

    Matches PyTorch:  out = relu( relu(x @ W1.T) @ W2.T ),  shape of x.
    """
    orig_shape = x.shape
    c_in = orig_shape[-1]
    c_pad, hidden = w1t.shape
    assert w2t.shape == (hidden, c_pad)
    assert c_pad == _round_up(c_in, LANE)

    x2d = x.reshape(-1, c_in)
    if c_pad != c_in:
        # Lane-pad channels (extra channels produce relu(0)=0; sliced off below).
        x2d = jnp.pad(x2d, ((0, 0), (0, c_pad - c_in)))
    B = x2d.shape[0]

    itemsize = jnp.dtype(x.dtype).itemsize
    vmem_limit = _vmem_limit_bytes()
    TB = _pick_batch_tile(B, c_pad, hidden, itemsize, vmem_limit)
    grid = (pl.cdiv(B, TB),)   # ragged tail block is fine: op is row-wise

    def _build(weight_mode):
        wkw = {} if weight_mode is None else dict(pipeline_mode=weight_mode)
        return pl.pallas_call(
            _fclayer_kernel,
            out_shape=jax.ShapeDtypeStruct((B, c_pad), x.dtype),
            grid=grid,
            in_specs=[
                # x: tiled along batch, pipelined across grid steps.
                pl.BlockSpec((TB, c_pad), lambda i: (i, 0)),
                # weights: constant block index -> fetched once, VMEM-resident;
                # single buffer (no point double-buffering an invariant block).
                pl.BlockSpec((c_pad, hidden), lambda i: (0, 0), **wkw),
                pl.BlockSpec((hidden, c_pad), lambda i: (0, 0), **wkw),
            ],
            out_specs=pl.BlockSpec((TB, c_pad), lambda i: (i, 0)),
            compiler_params=pltpu.CompilerParams(
                # batch axis is embarrassingly parallel -> shard across TCs (v7x).
                dimension_semantics=("parallel",),
                vmem_limit_bytes=vmem_limit,
            ),
        )

    try:
        out2d = _build(pl.Buffered(1))(x2d, w1t, w2t)
    except Exception:
        # Fallback for jax versions that reject buffer_count=1 on inputs.
        out2d = _build(None)(x2d, w1t, w2t)

    if c_pad != c_in:
        out2d = out2d[:, :c_in]
    return out2d.reshape(orig_shape)


if __name__ == "__main__":
    # Small shapes consistent with the module: batch=2, seq=16, c_in=128,
    # reduction=4 -> hidden=32.  Flattened batch = 32 rows -> 2 grid steps.
    BATCH, SEQ = 2, 16
    C_IN = 128
    REDUCTION = 4
    HIDDEN = C_IN // REDUCTION  # 32

    key = jax.random.PRNGKey(0)
    kx, k1, k2 = jax.random.split(key, 3)

    x = jax.random.normal(kx, (BATCH, SEQ, C_IN), dtype=jnp.float32)
    # Deterministic init mimicking nn.Linear's uniform(-1/sqrt(fan_in), 1/sqrt(fan_in))
    w1 = jax.random.uniform(k1, (HIDDEN, C_IN), dtype=jnp.float32,
                            minval=-1.0 / jnp.sqrt(C_IN), maxval=1.0 / jnp.sqrt(C_IN))
    w2 = jax.random.uniform(k2, (C_IN, HIDDEN), dtype=jnp.float32,
                            minval=-1.0 / jnp.sqrt(HIDDEN), maxval=1.0 / jnp.sqrt(HIDDEN))

    # One-time parameter prep (transpose + lane-pad) outside the forward path.
    w1t, w2t = prepare_fclayer_params(w1, w2)

    out = fclayer_forward(x, w1t, w2t)
    jax.block_until_ready(out)

    # Reference check in plain JAX (same semantics as the PyTorch forward).
    ref = jnp.maximum(jnp.maximum(x @ w1.T, 0.0) @ w2.T, 0.0)
    assert out.shape == x.shape
    assert jnp.allclose(out, ref, atol=2e-5, rtol=2e-5)

    print("KERNEL_OK")
</pallas_src>

<mosaic_0001>
module attributes {stable_mosaic.version = 11 : i64} {
  func.func @_fclayer_kernel(%arg0: i32, %arg1: memref<16x128xf32, #tpu.memory_space<vmem>>, %arg2: memref<128x32xf32, #tpu.memory_space<vmem>>, %arg3: memref<32x128xf32, #tpu.memory_space<vmem>>, %arg4: memref<16x128xf32, #tpu.memory_space<vmem>>) attributes {dimension_semantics = [#tpu.dimension_semantics<parallel>], iteration_bounds = array<i64: 2>, scalar_prefetch = 0 : i64, scratch_operands = 0 : i64, tpu.core_type = #tpu.core_type<tc>, window_params = [{transform_indices = @transform_0, window_bounds = array<i64: 16, 128>}, {pipeline_mode = #tpu.pipeline_mode<synchronous>, transform_indices = @transform_1, window_bounds = array<i64: 128, 32>}, {pipeline_mode = #tpu.pipeline_mode<synchronous>, transform_indices = @transform_2, window_bounds = array<i64: 32, 128>}, {transform_indices = @transform_3, window_bounds = array<i64: 16, 128>}]} {
    %c0 = arith.constant 0 : index
    %c0_0 = arith.constant 0 : index
    %0 = vector.load %arg1[%c0, %c0_0] : memref<16x128xf32, #tpu.memory_space<vmem>>, vector<16x128xf32>
    %c0_1 = arith.constant 0 : index
    %c0_2 = arith.constant 0 : index
    %1 = vector.load %arg2[%c0_1, %c0_2] : memref<128x32xf32, #tpu.memory_space<vmem>>, vector<128x32xf32>
    %cst = arith.constant dense<0.000000e+00> : vector<16x32xf32>
    %2 = tpu.matmul %0, %1, %cst {dimension_numbers = #tpu.dot_dimension_numbers<[1], [0], [0], [1], [0, 0, 1, 1], [], []>} : vector<16x128xf32>, vector<128x32xf32>, vector<16x32xf32> -> vector<16x32xf32>
    %cst_3 = arith.constant 0.000000e+00 : f32
    %3 = vector.broadcast %cst_3 : f32 to vector<16x32xf32>
    %4 = arith.maximumf %2, %3 : vector<16x32xf32>
    %c0_4 = arith.constant 0 : index
    %c0_5 = arith.constant 0 : index
    %5 = vector.load %arg3[%c0_4, %c0_5] : memref<32x128xf32, #tpu.memory_space<vmem>>, vector<32x128xf32>
    %cst_6 = arith.constant dense<0.000000e+00> : vector<16x128xf32>
    %6 = tpu.matmul %4, %5, %cst_6 {dimension_numbers = #tpu.dot_dimension_numbers<[1], [0], [0], [1], [0, 0, 1, 1], [], []>} : vector<16x32xf32>, vector<32x128xf32>, vector<16x128xf32> -> vector<16x128xf32>
    %cst_7 = arith.constant 0.000000e+00 : f32
    %7 = vector.broadcast %cst_7 : f32 to vector<16x128xf32>
    %8 = arith.maximumf %6, %7 : vector<16x128xf32>
    %c0_8 = arith.constant 0 : index
    %c0_9 = arith.constant 0 : index
    %9 = vector.load %arg4[%c0_8, %c0_9] : memref<16x128xf32, #tpu.memory_space<vmem>>, vector<16x128xf32>
    tpu.vector_store %arg4[%c0_8, %c0_9], %8 {strides = array<i32>} : memref<16x128xf32, #tpu.memory_space<vmem>>, vector<16x128xf32>,
    return
  }
  func.func @transform_0(%arg0: i32) -> (i32, i32) {
    %c0_i32 = arith.constant 0 : i32
    %c0_i32_0 = arith.constant 0 : i32
    return %arg0, %c0_i32 : i32, i32
  }
  func.func @transform_1(%arg0: i32) -> (i32, i32) {
    %c0_i32 = arith.constant 0 : i32
    %c0_i32_0 = arith.constant 0 : i32
    %c0_i32_1 = arith.constant 0 : i32
    return %c0_i32, %c0_i32_0 : i32, i32
  }
  func.func @transform_2(%arg0: i32) -> (i32, i32) {
    %c0_i32 = arith.constant 0 : i32
    %c0_i32_0 = arith.constant 0 : i32
    %c0_i32_1 = arith.constant 0 : i32
    return %c0_i32, %c0_i32_0 : i32, i32
  }
  func.func @transform_3(%arg0: i32) -> (i32, i32) {
    %c0_i32 = arith.constant 0 : i32
    %c0_i32_0 = arith.constant 0 : i32
    return %arg0, %c0_i32 : i32, i32
  }
}

module attributes {stable_mosaic.version = 11 : i64} {
  func.func @_fclayer_kernel(%arg0: i32, %arg1: memref<16x128xf32, #tpu.memory_space<vmem>>, %arg2: memref<128x32xf32, #tpu.memory_space<vmem>>, %arg3: memref<32x128xf32, #tpu.memory_space<vmem>>, %arg4: memref<16x128xf32, #tpu.memory_space<vmem>>) attributes {dimension_semantics = [#tpu.dimension_semantics<parallel>], iteration_bounds = array<i64: 2>, scalar_prefetch = 0 : i64, scratch_operands = 0 : i64, tpu.core_type = #tpu.core_type<tc>, window_params = [{transform_indices = @transform_0, window_bounds = array<i64: 16, 128>}, {pipeline_mode = #tpu.pipeline_mode<synchronous>, transform_indices = @transform_1, window_bounds = array<i64: 128, 32>}, {pipeline_mode = #tpu.pipeline_mode<synchronous>, transform_indices = @transform_2, window_bounds = array<i64: 32, 128>}, {transform_indices = @transform_3, window_bounds = array<i64: 16, 128>}]} {
    %c0 = arith.constant 0 : index
    %c0_0 = arith.constant 0 : index
    %0 = vector.load %arg1[%c0, %c0_0] : memref<16x128xf32, #tpu.memory_space<vmem>>, vector<16x128xf32>
    %c0_1 = arith.constant 0 : index
    %c0_2 = arith.constant 0 : index
    %1 = vector.load %arg2[%c0_1, %c0_2] : memref<128x32xf32, #tpu.memory_space<vmem>>, vector<128x32xf32>
    %cst = arith.constant dense<0.000000e+00> : vector<16x32xf32>
    %2 = tpu.matmul %0, %1, %cst {dimension_numbers = #tpu.dot_dimension_numbers<[1], [0], [0], [1], [0, 0, 1, 1], [], []>} : vector<16x128xf32>, vector<128x32xf32>, vector<16x32xf32> -> vector<16x32xf32>
    %cst_3 = arith.constant 0.000000e+00 : f32
    %3 = vector.broadcast %cst_3 : f32 to vector<16x32xf32>
    %4 = arith.maximumf %2, %3 : vector<16x32xf32>
    %c0_4 = arith.constant 0 : index
    %c0_5 = arith.constant 0 : index
    %5 = vector.load %arg3[%c0_4, %c0_5] : memref<32x128xf32, #tpu.memory_space<vmem>>, vector<32x128xf32>
    %cst_6 = arith.constant dense<0.000000e+00> : vector<16x128xf32>
    %6 = tpu.matmul %4, %5, %cst_6 {dimension_numbers = #tpu.dot_dimension_numbers<[1], [0], [0], [1], [0, 0, 1, 1], [], []>} : vector<16x32xf32>, vector<32x128xf32>, vector<16x128xf32> -> vector<16x128xf32>
    %cst_7 = arith.constant 0.000000e+00 : f32
    %7 = vector.broadcast %cst_7 : f32 to vector<16x128xf32>
    %8 = arith.maximumf %6, %7 : vector<16x128xf32>
    %c0_8 = arith.constant 0 : index
    %c0_9 = arith.constant 0 : index
    %9 = vector.load %arg4[%c0_8, %c0_9] : memref<16x128xf32, #tpu.memory_space<vmem>>, vector<16x128xf32>
    tpu.vector_store %arg4[%c0_8, %c0_9], %8 {strides = array<i32>} : memref<16x128xf32, #tpu.memory_space<vmem>>, vector<16x128xf32>,
    return
  }
  func.func @transform_0(%arg0: i32) -> (i32, i32) {
    %c0_i32 = arith.constant 0 : i32
    %c0_i32_0 = arith.constant 0 : i32
    return %arg0, %c0_i32 : i32, i32
  }
  func.func @transform_1(%arg0: i32) -> (i32, i32) {
    %c0_i32 = arith.constant 0 : i32
    %c0_i32_0 = arith.constant 0 : i32
    %c0_i32_1 = arith.constant 0 : i32
    return %c0_i32, %c0_i32_0 : i32, i32
  }
  func.func @transform_2(%arg0: i32) -> (i32, i32) {
    %c0_i32 = arith.constant 0 : i32
    %c0_i32_0 = arith.constant 0 : i32
    %c0_i32_1 = arith.constant 0 : i32
    return %c0_i32, %c0_i32_0 : i32, i32
  }
  func.func @transform_3(%arg0: i32) -> (i32, i32) {
    %c0_i32 = arith.constant 0 : i32
    %c0_i32_0 = arith.constant 0 : i32
    return %arg0, %c0_i32 : i32, i32
  }
}

</mosaic_0001>

<llo_original>
// kernel: tpu_custom_call.1
$region0: #{tpu_custom_call.1}
  #allocation0 [shape = 'u32[]', space=smem, size = 0x4, offset = 0x4, fixed_abs, tag = 'smem constant byte address 0x4 - core index']
  #allocation1 [shape = 'u32[144,128]{1,0:T(1,128)}', space=vmem, size = 0x12000, scoped, tag = 'internal scratch']
  %s0 = inlined_call_operand.vmem [shape: f32[32,128], index: 0, kind: input, shape index: {}]
  %s1 = inlined_call_operand.vmem [shape: f32[128,32], index: 1, kind: input, shape index: {}]
  %s2 = inlined_call_operand.vmem [shape: f32[32,128], index: 2, kind: input, shape index: {}]
  %s3 = inlined_call_operand.hbm [shape: f32[32,128], index: 3, kind: output, shape index: {}]
  %s4 = sld [smem:[#allocation0]]
  $region45: #{tpu_custom_call.1} parent=0
    _
  %s6 = ssub.s32 1, %s4
  %s7 = scalar_select 0, %s6, %s4
  $region1: #{tpu_custom_call.1} parent=0
    #allocation2 [shape = 'u8[16384]{0}', space=vmem, size = 0x4000, scoped, tag = 'output window, operand 0']
    #allocation3 [shape = 's32[2]{0}', space=sflag, size = 0x8, scoped, tag = 'scoped memory for tpu_custom_call.1']
    %8 = vsyncpa [#allocation3], 0
    %s9 = scalar_lea.sflag [#allocation3], 1
    %10 = vsyncpa %s9, 0
    loop: start=0, step=1, limit=4
    $region2: #{tpu_custom_call.1} parent=1 // loop_pre_header
      _
    $region3: #{tpu_custom_call.1} parent=1 // loop_header
      %s12 = sphi 0, %s16
      %p13 = scmp.ge.s32.totalorder %s12, 4
      %s22 = sphi 0, %s24
      %s25 = sphi 0, %s22
      %s26 = sphi 0, %s25
      %s42 = sphi 0, %s26
      %s46 = sphi 0, %s46
      %s48 = sphi 0, %s46
      %s49 = sphi 0, %s48
      %s63 = sphi 0, %s49
      %s67 = sphi 0, %s67
      %s69 = sphi 0, %s67
      %s70 = sphi 0, %s69
      %s84 = sphi 0, %s70
      %s90 = sphi 0, %s92
      %s93 = sphi 0, %s90
      %s94 = sphi 0, %s93
      %s110 = sphi 0, %s94
    $region4: #{tpu_custom_call.1} parent=1 // loop_header_branch
      %15 = sbr.rel (%p13) target = $region8
    $region5: #{tpu_custom_call.1} parent=1 // loop_body
      %s17 = ssub.s32 %s12, 1
      %s18 = ssub.s32 %s12, 2
      %s19 = sadd.s32 %s12, 1
      %s20 = ssub.s32 %s12, %s19
      %p21 = scmp.eq.s32.totalorder %s20, 0
      %s23 = sadd.s32 %s22, 1
      %s24 = scalar_select %p21, %s22, %s23
      %p27 = pneg %p21
      %p28 = scmp.eq.s32.totalorder %s12, 1
      %p29 = por %p27, %p28
      %p30 = scmp.ne.s32.totalorder %s22, %s25
      %p31 = scmp.eq.s32.totalorder %s12, 0
      %p32 = por %p30, %p31
      %p33 = scmp.ne.s32.totalorder %s22, %s25
      %p34 = scmp.eq.s32.totalorder %s17, 1
      %p35 = por %p33, %p34
      %p36 = scmp.ne.s32.totalorder %s25, %s26
      %p37 = scmp.eq.s32.totalorder %s17, 0
      %p38 = por %p36, %p37
      %p39 = scmp.ne.s32.totalorder %s25, %s26
      %p40 = scmp.eq.s32.totalorder %s18, 1
      %p41 = por %p39, %p40
      %p43 = scmp.ne.s32.totalorder %s26, %s42
      %p44 = scmp.eq.s32.totalorder %s18, 0
      %p45 = por %p43, %p44
      %s47 = sadd.s32 %s46, 1
      %p50 = scmp.eq.s32.totalorder %s12, 1
      %p51 = scmp.ne.s32.totalorder %s46, %s48
      %p52 = scmp.eq.s32.totalorder %s12, 0
      %p53 = por %p51, %p52
      %p54 = scmp.ne.s32.totalorder %s46, %s48
      %p55 = scmp.eq.s32.totalorder %s17, 1
      %p56 = por %p54, %p55
      %p57 = scmp.ne.s32.totalorder %s48, %s49
      %p58 = scmp.eq.s32.totalorder %s17, 0
      %p59 = por %p57, %p58
      %p60 = scmp.ne.s32.totalorder %s48, %s49
      %p61 = scmp.eq.s32.totalorder %s18, 1
      %p62 = por %p60, %p61
      %p64 = scmp.ne.s32.totalorder %s49, %s63
      %p65 = scmp.eq.s32.totalorder %s18, 0
      %p66 = por %p64, %p65
      %s68 = sadd.s32 %s67, 1
      %p71 = scmp.eq.s32.totalorder %s12, 1
      %p72 = scmp.ne.s32.totalorder %s67, %s69
      %p73 = scmp.eq.s32.totalorder %s12, 0
      %p74 = por %p72, %p73
      %p75 = scmp.ne.s32.totalorder %s67, %s69
      %p76 = scmp.eq.s32.totalorder %s17, 1
      %p77 = por %p75, %p76
      %p78 = scmp.ne.s32.totalorder %s69, %s70
      %p79 = scmp.eq.s32.totalorder %s17, 0
      %p80 = por %p78, %p79
      %p81 = scmp.ne.s32.totalorder %s69, %s70
      %p82 = scmp.eq.s32.totalorder %s18, 1
      %p83 = por %p81, %p82
      %p85 = scmp.ne.s32.totalorder %s70, %s84
      %p86 = scmp.eq.s32.totalorder %s18, 0
      %p87 = por %p85, %p86
      %s88 = ssub.s32 %s12, %s19
      %p89 = scmp.eq.s32.totalorder %s88, 0
      %s91 = sadd.s32 %s90, 1
      %s92 = scalar_select %p89, %s90, %s91
      %p95 = pneg %p89
      %p96 = scmp.eq.s32.totalorder %s12, 1
      %p97 = por %p95, %p96
      %p98 = scmp.ne.s32.totalorder %s90, %s93
      %p99 = scmp.eq.s32.totalorder %s12, 0
      %p100 = por %p98, %p99
      %p101 = scmp.ne.s32.totalorder %s90, %s93
      %p102 = scmp.eq.s32.totalorder %s17, 1
      %p103 = por %p101, %p102
      %p104 = scmp.ne.s32.totalorder %s93, %s94
      %p105 = scmp.eq.s32.totalorder %s17, 0
      %p106 = por %p104, %p105
      %p107 = scmp.ne.s32.totalorder %s93, %s94
      %p108 = scmp.eq.s32.totalorder %s18, 1
      %p109 = por %p107, %p108
      %p111 = scmp.ne.s32.totalorder %s94, %s110
      %p112 = scmp.eq.s32.totalorder %s18, 0
      %p113 = por %p111, %p112
      %p114 = scmp.le.s32.totalorder 1, %s12
      %p115 = scmp.lt.s32.totalorder %s12, 3
      %p116 = pnand %p114, %p115
      %p117 = pneg %p116
      // Predicated region
      $region9: #{tpu_custom_call.1} parent=5 // pred_check
        _
      $region10: #{tpu_custom_call.1} parent=5 // pred_check_branch
        %119 = sbr.rel (%p116) target = $region12
      $region11: #{tpu_custom_call.1} parent=5 // pred_region
        %s120 = ssub.s32 %s12, 1
        // Predicated region
        $region13: #{tpu_custom_call.1} parent=11 // pred_check
          %p121 = pneg %p59
        $region14: #{tpu_custom_call.1} parent=11 // pred_check_branch
          %123 = sbr.rel (%p121) target = $region16
        $region15: #{tpu_custom_call.1} parent=11 // pred_region
          _
        $region16: #{tpu_custom_call.1} parent=11 // pred_fallthru
          _
        // Predicated region
        $region17: #{tpu_custom_call.1} parent=11 // pred_check
          %p124 = pneg %p80
        $region18: #{tpu_custom_call.1} parent=11 // pred_check_branch
          %126 = sbr.rel (%p124) target = $region20
        $region19: #{tpu_custom_call.1} parent=11 // pred_region
          _
        $region20: #{tpu_custom_call.1} parent=11 // pred_fallthru
          _
      $region12: #{tpu_custom_call.1} parent=5 // pred_fallthru
        _
      %p127 = scmp.lt.s32.totalorder %s12, 2
      // Predicated region
      $region21: #{tpu_custom_call.1} parent=5 // pred_check
        %p128 = pneg %p127
      $region22: #{tpu_custom_call.1} parent=5 // pred_check_branch
        %130 = sbr.rel (%p128) target = $region24
      $region23: #{tpu_custom_call.1} parent=5 // pred_region
        // Predicated region
        $region25: #{tpu_custom_call.1} parent=23 // pred_check
          %p131 = pneg %p32
        $region26: #{tpu_custom_call.1} parent=23 // pred_check_branch
          %133 = sbr.rel (%p131) target = $region28
        $region27: #{tpu_custom_call.1} parent=23 // pred_region
          %s134 = smul.u32 2, %s12
          %p135 = scmp.lt.s32.totalorder %s134, 3
          %s136 = scalar_select %p135, %s134, 3
          %s137 = smul.addr %s136, 8
          %s138 = scalar_lea.vmem %s0, %s137
          %s139 = smul.u32 2, %s12
        $region28: #{tpu_custom_call.1} parent=23 // pred_fallthru
          _
      $region24: #{tpu_custom_call.1} parent=5 // pred_fallthru
        _
      %p140 = scmp.le.s32.totalorder 1, %s12
      %p141 = scmp.lt.s32.totalorder %s12, 3
      %p142 = pnand %p140, %p141
      %p143 = pneg %p142
      // Predicated region
      $region29: #{tpu_custom_call.1} parent=5 // pred_check
        _
      $region30: #{tpu_custom_call.1} parent=5 // pred_check_branch
        %145 = sbr.rel (%p142) target = $region32
      $region31: #{tpu_custom_call.1} parent=5 // pred_region
        %s146 = ssub.s32 %s12, 1
        %s147 = smul.u32 2, %s17
        %p148 = scmp.lt.s32.totalorder %s147, 3
        %s149 = scalar_select %p148, %s147, 3
        %s150 = smul.addr %s149, 8
        %s151 = scalar_lea.vmem %s0, %s150
        %p152 = pneg %p38
        %p153 = pneg %p35
        %p154 = pneg %p59
        %p155 = pneg %p56
        %p156 = pneg %p80
        %p157 = pneg %p77
        %p158 = pneg %p106
        %p159 = pneg %p103
        %s160 = sand.u32 %s93, 1
        %s161 = scalar_lea.sflag [#allocation3], %s160
        %s162 = sand.u32 %s93, 1
        %s163 = smul.addr %s162, 16
        %s164 = scalar_lea.vmem [#allocation2], %s163
        %s165 = smul.u32 2, %s17
        %p166 = scmp.lt.s32.totalorder %s165, 3
        %s167 = scalar_select %p166, %s165, 3
        %s168 = smul.addr %s167, 8
        %s169 = scalar_lea.vmem %s0, %s168
        %s170 = smul.u32 2, %s17
        %s171 = smul.u32 2, %s17
        %v172 = vld [vmem:[%s169] sm:$0xff]
        %v173 = vld [vmem:[%s169 + $0x8] sm:$0xff]
        %v174 = vld [vmem:[%s1] sm:$0xff]
        %v175 = vld [vmem:[%s1 + $0x8] sm:$0xff]
        %v176 = vld [vmem:[%s1 + $0x10] sm:$0xff]
        %v177 = vld [vmem:[%s1 + $0x18] sm:$0xff]
        %v178 = vld [vmem:[%s1 + $0x20] sm:$0xff]
        %v179 = vld [vmem:[%s1 + $0x28] sm:$0xff]
        %v180 = vld [vmem:[%s1 + $0x30] sm:$0xff]
        %v181 = vld [vmem:[%s1 + $0x38] sm:$0xff]
        %v182 = vld [vmem:[%s1 + $0x40] sm:$0xff]
        %v183 = vld [vmem:[%s1 + $0x48] sm:$0xff]
        %v184 = vld [vmem:[%s1 + $0x50] sm:$0xff]
        %v185 = vld [vmem:[%s1 + $0x58] sm:$0xff]
        %v186 = vld [vmem:[%s1 + $0x60] sm:$0xff]
        %v187 = vld [vmem:[%s1 + $0x68] sm:$0xff]
        %v188 = vld [vmem:[%s1 + $0x70] sm:$0xff]
        %v189 = vld [vmem:[%s1 + $0x78] sm:$0xff]
        %190 = vmatprep.subr.mxu0 0.0
        %191 = vmatpush1.msra.mxu0 %v174
        %192 = vmatprep.subr.mxu0 0.0
        %193 = vmatpush1.msra.mxu0 %v175
        %194 = vmatprep.subr.mxu0 0.0
        %195 = vmatpush1.msra.mxu0 %v176
        %196 = vmatprep.subr.mxu0 0.0
        %197 = vmatpush1.msra.mxu0 %v177
        %198 = vmatprep.subr.mxu0 0.0
        %199 = vmatpush1.msra.mxu0 %v178
        %200 = vmatprep.subr.mxu0 0.0
        %201 = vmatpush1.msra.mxu0 %v179
        %202 = vmatprep.subr.mxu0 0.0
        %203 = vmatpush1.msra.mxu0 %v180
        %204 = vmatprep.subr.mxu0 0.0
        %205 = vmatpush1.msra.mxu0 %v181
        %206 = vmatprep.subr.mxu0 0.0
        %207 = vmatpush1.msra.mxu0 %v182
        %208 = vmatprep.subr.mxu0 0.0
        %209 = vmatpush1.msra.mxu0 %v183
        %210 = vmatprep.subr.mxu0 0.0
        %211 = vmatpush1.msra.mxu0 %v184
        %212 = vmatprep.subr.mxu0 0.0
        %213 = vmatpush1.msra.mxu0 %v185
        %214 = vmatprep.subr.mxu0 0.0
        %215 = vmatpush1.msra.mxu0 %v186
        %216 = vmatprep.subr.mxu0 0.0
        %217 = vmatpush1.msra.mxu0 %v187
        %218 = vmatprep.subr.mxu0 0.0
        %219 = vmatpush1.msra.mxu0 %v188
        %220 = vmatprep.subr.mxu0 0.0
        %221 = vmatpush1.msra.mxu0 %v189
        %222 = vmatprep.subr.mxu0 0.0
        %223 = vmatpush1.msra.mxu0 0.0
        %224 = vmatprep.subr.mxu0 0.0
        %225 = vmatpush1.msra.mxu0 0.0
        %226 = vmatprep.subr.mxu0 0.0
        %227 = vmatpush1.msra.mxu0 0.0
        %228 = vmatprep.subr.mxu0 0.0
        %229 = vmatpush1.msra.mxu0 0.0
        %230 = vmatprep.subr.mxu0 0.0
        %231 = vmatpush1.msra.mxu0 0.0
        %232 = vmatprep.subr.mxu0 0.0
        %233 = vmatpush1.msra.mxu0 0.0
        %234 = vmatprep.subr.mxu0 0.0
        %235 = vmatpush1.msra.mxu0 0.0
        %236 = vmatprep.subr.mxu0 0.0
        %237 = vmatpush1.msra.mxu0 0.0
        %238 = vmatprep.subr.mxu0 0.0
        %239 = vmatpush1.msra.mxu0 0.0
        %240 = vmatprep.subr.mxu0 0.0
        %241 = vmatpush1.msra.mxu0 0.0
        %242 = vmatprep.subr.mxu0 0.0
        %243 = vmatpush1.msra.mxu0 0.0
        %244 = vmatprep.subr.mxu0 0.0
        %245 = vmatpush1.msra.mxu0 0.0
        %246 = vmatprep.subr.mxu0 0.0
        %247 = vmatpush1.msra.mxu0 0.0
        %248 = vmatprep.subr.mxu0 0.0
        %249 = vmatpush1.msra.mxu0 0.0
        %250 = vmatprep.subr.mxu0 0.0
        %251 = vmatpush1.msra.mxu0 0.0
        %252 = vmatprep.subr.mxu0 0.0
        %253 = vmatpush1.msra.mxu0 0.0
        %254 = vmatprep.mubr.f32.mxu0 0.0
        %255 = vmatmul.mubr.f32.gmra.mrb[0].mxu0 %v172
        %v256 = vpop.f32.mrb[0].mxu0
        %v257 = vadd.f32 0.0, %v256
        %v258 = vpop.f32.mrb[0].mxu0
        %259 = vmatprep.mubr.f32.mxu0 0.0
        %260 = vmatmul.mubr.f32.gmra.mrb[0].mxu0 %v173
        %v261 = vpop.f32.mrb[0].mxu0
        %v262 = vadd.f32 0.0, %v261
        %v263 = vpop.f32.mrb[0].mxu0
        %264 = vdwg.mxu0
        %v265 = vmax.f32 %v257, 0.0
        %v266 = vmax.f32 %v262, 0.0
        %v267 = vld [vmem:[%s2] sm:$0xff]
        %v268 = vld [vmem:[%s2 + $0x8] sm:$0xff]
        %v269 = vld [vmem:[%s2 + $0x10] sm:$0xff]
        %v270 = vld [vmem:[%s2 + $0x18] sm:$0xff]
        %vm271 = vcmask 261120
        %v273 = vsel %vm271, %v265, 0
        %v276 = vsel %vm271, %v266, 0
        %278 = vmatprep.subr.mxu0 0.0
        %279 = vmatpush1.msra.mxu0 %v267
        %280 = vmatprep.subr.mxu0 0.0
        %281 = vmatpush1.msra.mxu0 %v268
        %282 = vmatprep.subr.mxu0 0.0
        %283 = vmatpush1.msra.mxu0 %v269
        %284 = vmatprep.subr.mxu0 0.0
        %285 = vmatpush1.msra.mxu0 %v270
        %286 = vmatprep.subr.mxu0 0.0
        %287 = vmatpush1.msra.mxu0 0.0
        %288 = vmatprep.subr.mxu0 0.0
        %289 = vmatpush1.msra.mxu0 0.0
        %290 = vmatprep.subr.mxu0 0.0
        %291 = vmatpush1.msra.mxu0 0.0
        %292 = vmatprep.subr.mxu0 0.0
        %293 = vmatpush1.msra.mxu0 0.0
        %294 = vmatprep.subr.mxu0 0.0
        %295 = vmatpush1.msra.mxu0 0.0
        %296 = vmatprep.subr.mxu0 0.0
        %297 = vmatpush1.msra.mxu0 0.0
        %298 = vmatprep.subr.mxu0 0.0
        %299 = vmatpush1.msra.mxu0 0.0
        %300 = vmatprep.subr.mxu0 0.0
        %301 = vmatpush1.msra.mxu0 0.0
        %302 = vmatprep.subr.mxu0 0.0
        %303 = vmatpush1.msra.mxu0 0.0
        %304 = vmatprep.subr.mxu0 0.0
        %305 = vmatpush1.msra.mxu0 0.0
        %306 = vmatprep.subr.mxu0 0.0
        %307 = vmatpush1.msra.mxu0 0.0
        %308 = vmatprep.subr.mxu0 0.0
        %309 = vmatpush1.msra.mxu0 0.0
        %310 = vmatprep.subr.mxu0 0.0
        %311 = vmatpush1.msra.mxu0 0.0
        %312 = vmatprep.subr.mxu0 0.0
        %313 = vmatpush1.msra.mxu0 0.0
        %314 = vmatprep.subr.mxu0 0.0
        %315 = vmatpush1.msra.mxu0 0.0
        %316 = vmatprep.subr.mxu0 0.0
        %317 = vmatpush1.msra.mxu0 0.0
        %318 = vmatprep.subr.mxu0 0.0
        %319 = vmatpush1.msra.mxu0 0.0
        %320 = vmatprep.subr.mxu0 0.0
        %321 = vmatpush1.msra.mxu0 0.0
        %322 = vmatprep.subr.mxu0 0.0
        %323 = vmatpush1.msra.mxu0 0.0
        %324 = vmatprep.subr.mxu0 0.0
        %325 = vmatpush1.msra.mxu0 0.0
        %326 = vmatprep.subr.mxu0 0.0
        %327 = vmatpush1.msra.mxu0 0.0
        %328 = vmatprep.subr.mxu0 0.0
        %329 = vmatpush1.msra.mxu0 0.0
        %330 = vmatprep.subr.mxu0 0.0
        %331 = vmatpush1.msra.mxu0 0.0
        %332 = vmatprep.subr.mxu0 0.0
        %333 = vmatpush1.msra.mxu0 0.0
        %334 = vmatprep.subr.mxu0 0.0
        %335 = vmatpush1.msra.mxu0 0.0
        %336 = vmatprep.subr.mxu0 0.0
        %337 = vmatpush1.msra.mxu0 0.0
        %338 = vmatprep.subr.mxu0 0.0
        %339 = vmatpush1.msra.mxu0 0.0
        %340 = vmatprep.subr.mxu0 0.0
        %341 = vmatpush1.msra.mxu0 0.0
        %342 = vmatprep.mubr.f32.mxu0 0.0
        %343 = vmatmul.mubr.f32.gmra.mrb[0].mxu0 %v273
        %v344 = vpop.f32.mrb[0].mxu0
        %v345 = vadd.f32 0.0, %v344
        %v346 = vpop.f32.mrb[0].mxu0
        %347 = vmatprep.mubr.f32.mxu0 0.0
        %348 = vmatmul.mubr.f32.gmra.mrb[0].mxu0 %v276
        %v349 = vpop.f32.mrb[0].mxu0
        %v350 = vadd.f32 0.0, %v349
        %v351 = vpop.f32.mrb[0].mxu0
        %352 = vdwg.mxu0
        %v353 = vmax.f32 %v345, 0.0
        %v354 = vmax.f32 %v350, 0.0
        %355 = vst [vmem:[%s164] sm:$0xff] %v353
        %356 = vst [vmem:[%s164 + $0x8] sm:$0xff] %v354
        %s357 = sand.u32 %s93, 1
        %s358 = scalar_lea.sflag [#allocation3], %s357
        %s359 = sand.u32 %s93, 1
        %s360 = smul.addr %s359, 16
        %s361 = scalar_lea.vmem [#allocation2], %s360
        // Predicated region
        $region33: #{tpu_custom_call.1} parent=31 // pred_check
          %p362 = pneg %p103
        $region34: #{tpu_custom_call.1} parent=31 // pred_check_branch
          %364 = sbr.rel (%p362) target = $region36
        $region35: #{tpu_custom_call.1} parent=31 // pred_region
          %s365 = smul.u32 2, %s17
          %s367 = ssub.s32 256, 256
          %368 = vsyncadd %s358, %s367
          %s369 = smul.addr %s365, 128
          %s370 = scalar_lea.hbm %s3, %s369
          %s371 = sshll.u32 %s361, 4
          %s372 = int_to_ptr.vmem [resolvable:$true] %s371
          %377 = dma.vmem_to_hbm [thread:$0]  %s372, 256, %s370, %s358, 128, 128, 8
        $region36: #{tpu_custom_call.1} parent=31 // pred_fallthru
          _
      $region32: #{tpu_custom_call.1} parent=5 // pred_fallthru
        _
      %p378 = scmp.le.s32.totalorder 2, %s12
      // Predicated region
      $region37: #{tpu_custom_call.1} parent=5 // pred_check
        %p379 = pneg %p378
      $region38: #{tpu_custom_call.1} parent=5 // pred_check_branch
        %381 = sbr.rel (%p379) target = $region40
      $region39: #{tpu_custom_call.1} parent=5 // pred_region
        %s382 = ssub.s32 %s12, 2
        // Predicated region
        $region41: #{tpu_custom_call.1} parent=39 // pred_check
          %p383 = pneg %p109
        $region42: #{tpu_custom_call.1} parent=39 // pred_check_branch
          %385 = sbr.rel (%p383) target = $region44
        $region43: #{tpu_custom_call.1} parent=39 // pred_region
          %s386 = sand.u32 %s94, 1
          %s387 = scalar_lea.sflag [#allocation3], %s386
          %s388 = sand.u32 %s94, 1
          %s389 = smul.addr %s388, 16
          %s390 = scalar_lea.vmem [#allocation2], %s389
          %391 = dma.done %s387, 256
        $region44: #{tpu_custom_call.1} parent=39 // pred_fallthru
          _
      $region40: #{tpu_custom_call.1} parent=5 // pred_fallthru
        _
    $region6: #{tpu_custom_call.1} parent=1 // loop_footer
      %s16 = sadd.s32 1, %s12
    $region7: #{tpu_custom_call.1} parent=1 // loop_footer_branch
      %11 = sbr.rel target = $region3
    $region8: #{tpu_custom_call.1} parent=1 // loop_exit
      _
    %392 = vsyncpa [#allocation3], 1
    %s393 = scalar_lea.sflag [#allocation3], 1
    %394 = vsyncpa %s393, 1

// kernel: tpu_custom_call.1
$region0: #{tpu_custom_call.1}
  #allocation0 [shape = 'u32[]', space=smem, size = 0x4, offset = 0x4, fixed_abs, tag = 'smem constant byte address 0x4 - core index']
  #allocation1 [shape = 'u32[144,128]{1,0:T(1,128)}', space=vmem, size = 0x12000, scoped, tag = 'internal scratch']
  %s0 = inlined_call_operand.vmem [shape: f32[32,128], index: 0, kind: input, shape index: {}]
  %s1 = inlined_call_operand.vmem [shape: f32[128,32], index: 1, kind: input, shape index: {}]
  %s2 = inlined_call_operand.vmem [shape: f32[32,128], index: 2, kind: input, shape index: {}]
  %s3 = inlined_call_operand.hbm [shape: f32[32,128], index: 3, kind: output, shape index: {}]
  %s4 = sld [smem:[#allocation0]]
  $region45: #{tpu_custom_call.1} parent=0
    _
  %s6 = ssub.s32 1, %s4
  %s7 = scalar_select 0, %s6, %s4
  $region1: #{tpu_custom_call.1} parent=0
    #allocation2 [shape = 'u8[16384]{0}', space=vmem, size = 0x4000, scoped, tag = 'output window, operand 0']
    #allocation3 [shape = 's32[2]{0}', space=sflag, size = 0x8, scoped, tag = 'scoped memory for tpu_custom_call.1']
    %8 = vsyncpa [#allocation3], 0
    %s9 = scalar_lea.sflag [#allocation3], 1
    %10 = vsyncpa %s9, 0
    loop: start=0, step=1, limit=4
    $region2: #{tpu_custom_call.1} parent=1 // loop_pre_header
      _
    $region3: #{tpu_custom_call.1} parent=1 // loop_header
      %s12 = sphi 0, %s16
      %p13 = scmp.ge.s32.totalorder %s12, 4
      %s22 = sphi 0, %s24
      %s25 = sphi 0, %s22
      %s26 = sphi 0, %s25
      %s42 = sphi 0, %s26
      %s46 = sphi 0, %s46
      %s48 = sphi 0, %s46
      %s49 = sphi 0, %s48
      %s63 = sphi 0, %s49
      %s67 = sphi 0, %s67
      %s69 = sphi 0, %s67
      %s70 = sphi 0, %s69
      %s84 = sphi 0, %s70
      %s90 = sphi 0, %s92
      %s93 = sphi 0, %s90
      %s94 = sphi 0, %s93
      %s110 = sphi 0, %s94
    $region4: #{tpu_custom_call.1} parent=1 // loop_header_branch
      %15 = sbr.rel (%p13) target = $region8
    $region5: #{tpu_custom_call.1} parent=1 // loop_body
      %s17 = ssub.s32 %s12, 1
      %s18 = ssub.s32 %s12, 2
      %s19 = sadd.s32 %s12, 1
      %s20 = ssub.s32 %s12, %s19
      %p21 = scmp.eq.s32.totalorder %s20, 0
      %s23 = sadd.s32 %s22, 1
      %s24 = scalar_select %p21, %s22, %s23
      %p27 = pneg %p21
      %p28 = scmp.eq.s32.totalorder %s12, 1
      %p29 = por %p27, %p28
      %p30 = scmp.ne.s32.totalorder %s22, %s25
      %p31 = scmp.eq.s32.totalorder %s12, 0
      %p32 = por %p30, %p31
      %p33 = scmp.ne.s32.totalorder %s22, %s25
      %p34 = scmp.eq.s32.totalorder %s17, 1
      %p35 = por %p33, %p34
      %p36 = scmp.ne.s32.totalorder %s25, %s26
      %p37 = scmp.eq.s32.totalorder %s17, 0
      %p38 = por %p36, %p37
      %p39 = scmp.ne.s32.totalorder %s25, %s26
      %p40 = scmp.eq.s32.totalorder %s18, 1
      %p41 = por %p39, %p40
      %p43 = scmp.ne.s32.totalorder %s26, %s42
      %p44 = scmp.eq.s32.totalorder %s18, 0
      %p45 = por %p43, %p44
      %s47 = sadd.s32 %s46, 1
      %p50 = scmp.eq.s32.totalorder %s12, 1
      %p51 = scmp.ne.s32.totalorder %s46, %s48
      %p52 = scmp.eq.s32.totalorder %s12, 0
      %p53 = por %p51, %p52
      %p54 = scmp.ne.s32.totalorder %s46, %s48
      %p55 = scmp.eq.s32.totalorder %s17, 1
      %p56 = por %p54, %p55
      %p57 = scmp.ne.s32.totalorder %s48, %s49
      %p58 = scmp.eq.s32.totalorder %s17, 0
      %p59 = por %p57, %p58
      %p60 = scmp.ne.s32.totalorder %s48, %s49
      %p61 = scmp.eq.s32.totalorder %s18, 1
      %p62 = por %p60, %p61
      %p64 = scmp.ne.s32.totalorder %s49, %s63
      %p65 = scmp.eq.s32.totalorder %s18, 0
      %p66 = por %p64, %p65
      %s68 = sadd.s32 %s67, 1
      %p71 = scmp.eq.s32.totalorder %s12, 1
      %p72 = scmp.ne.s32.totalorder %s67, %s69
      %p73 = scmp.eq.s32.totalorder %s12, 0
      %p74 = por %p72, %p73
      %p75 = scmp.ne.s32.totalorder %s67, %s69
      %p76 = scmp.eq.s32.totalorder %s17, 1
      %p77 = por %p75, %p76
      %p78 = scmp.ne.s32.totalorder %s69, %s70
      %p79 = scmp.eq.s32.totalorder %s17, 0
      %p80 = por %p78, %p79
      %p81 = scmp.ne.s32.totalorder %s69, %s70
      %p82 = scmp.eq.s32.totalorder %s18, 1
      %p83 = por %p81, %p82
      %p85 = scmp.ne.s32.totalorder %s70, %s84
      %p86 = scmp.eq.s32.totalorder %s18, 0
      %p87 = por %p85, %p86
      %s88 = ssub.s32 %s12, %s19
      %p89 = scmp.eq.s32.totalorder %s88, 0
      %s91 = sadd.s32 %s90, 1
      %s92 = scalar_select %p89, %s90, %s91
      %p95 = pneg %p89
      %p96 = scmp.eq.s32.totalorder %s12, 1
      %p97 = por %p95, %p96
      %p98 = scmp.ne.s32.totalorder %s90, %s93
      %p99 = scmp.eq.s32.totalorder %s12, 0
      %p100 = por %p98, %p99
      %p101 = scmp.ne.s32.totalorder %s90, %s93
      %p102 = scmp.eq.s32.totalorder %s17, 1
      %p103 = por %p101, %p102
      %p104 = scmp.ne.s32.totalorder %s93, %s94
      %p105 = scmp.eq.s32.totalorder %s17, 0
      %p106 = por %p104, %p105
      %p107 = scmp.ne.s32.totalorder %s93, %s94
      %p108 = scmp.eq.s32.totalorder %s18, 1
      %p109 = por %p107, %p108
      %p111 = scmp.ne.s32.totalorder %s94, %s110
      %p112 = scmp.eq.s32.totalorder %s18, 0
      %p113 = por %p111, %p112
      %p114 = scmp.le.s32.totalorder 1, %s12
      %p115 = scmp.lt.s32.totalorder %s12, 3
      %p116 = pnand %p114, %p115
      %p117 = pneg %p116
      // Predicated region
      $region9: #{tpu_custom_call.1} parent=5 // pred_check
        _
      $region10: #{tpu_custom_call.1} parent=5 // pred_check_branch
        %119 = sbr.rel (%p116) target = $region12
      $region11: #{tpu_custom_call.1} parent=5 // pred_region
        %s120 = ssub.s32 %s12, 1
        // Predicated region
        $region13: #{tpu_custom_call.1} parent=11 // pred_check
          %p121 = pneg %p59
        $region14: #{tpu_custom_call.1} parent=11 // pred_check_branch
          %123 = sbr.rel (%p121) target = $region16
        $region15: #{tpu_custom_call.1} parent=11 // pred_region
          _
        $region16: #{tpu_custom_call.1} parent=11 // pred_fallthru
          _
        // Predicated region
        $region17: #{tpu_custom_call.1} parent=11 // pred_check
          %p124 = pneg %p80
        $region18: #{tpu_custom_call.1} parent=11 // pred_check_branch
          %126 = sbr.rel (%p124) target = $region20
        $region19: #{tpu_custom_call.1} parent=11 // pred_region
          _
        $region20: #{tpu_custom_call.1} parent=11 // pred_fallthru
          _
      $region12: #{tpu_custom_call.1} parent=5 // pred_fallthru
        _
      %p127 = scmp.lt.s32.totalorder %s12, 2
      // Predicated region
      $region21: #{tpu_custom_call.1} parent=5 // pred_check
        %p128 = pneg %p127
      $region22: #{tpu_custom_call.1} parent=5 // pred_check_branch
        %130 = sbr.rel (%p128) target = $region24
      $region23: #{tpu_custom_call.1} parent=5 // pred_region
        // Predicated region
        $region25: #{tpu_custom_call.1} parent=23 // pred_check
          %p131 = pneg %p32
        $region26: #{tpu_custom_call.1} parent=23 // pred_check_branch
          %133 = sbr.rel (%p131) target = $region28
        $region27: #{tpu_custom_call.1} parent=23 // pred_region
          %s134 = smul.u32 2, %s12
          %p135 = scmp.lt.s32.totalorder %s134, 3
          %s136 = scalar_select %p135, %s134, 3
          %s137 = smul.addr %s136, 8
          %s138 = scalar_lea.vmem %s0, %s137
          %s139 = smul.u32 2, %s12
        $region28: #{tpu_custom_call.1} parent=23 // pred_fallthru
          _
      $region24: #{tpu_custom_call.1} parent=5 // pred_fallthru
        _
      %p140 = scmp.le.s32.totalorder 1, %s12
      %p141 = scmp.lt.s32.totalorder %s12, 3
      %p142 = pnand %p140, %p141
      %p143 = pneg %p142
      // Predicated region
      $region29: #{tpu_custom_call.1} parent=5 // pred_check
        _
      $region30: #{tpu_custom_call.1} parent=5 // pred_check_branch
        %145 = sbr.rel (%p142) target = $region32
      $region31: #{tpu_custom_call.1} parent=5 // pred_region
        %s146 = ssub.s32 %s12, 1
        %s147 = smul.u32 2, %s17
        %p148 = scmp.lt.s32.totalorder %s147, 3
        %s149 = scalar_select %p148, %s147, 3
        %s150 = smul.addr %s149, 8
        %s151 = scalar_lea.vmem %s0, %s150
        %p152 = pneg %p38
        %p153 = pneg %p35
        %p154 = pneg %p59
        %p155 = pneg %p56
        %p156 = pneg %p80
        %p157 = pneg %p77
        %p158 = pneg %p106
        %p159 = pneg %p103
        %s160 = sand.u32 %s93, 1
        %s161 = scalar_lea.sflag [#allocation3], %s160
        %s162 = sand.u32 %s93, 1
        %s163 = smul.addr %s162, 16
        %s164 = scalar_lea.vmem [#allocation2], %s163
        %s165 = smul.u32 2, %s17
        %p166 = scmp.lt.s32.totalorder %s165, 3
        %s167 = scalar_select %p166, %s165, 3
        %s168 = smul.addr %s167, 8
        %s169 = scalar_lea.vmem %s0, %s168
        %s170 = smul.u32 2, %s17
        %s171 = smul.u32 2, %s17
        %v172 = vld [vmem:[%s169] sm:$0xff]
        %v173 = vld [vmem:[%s169 + $0x8] sm:$0xff]
        %v174 = vld [vmem:[%s1] sm:$0xff]
        %v175 = vld [vmem:[%s1 + $0x8] sm:$0xff]
        %v176 = vld [vmem:[%s1 + $0x10] sm:$0xff]
        %v177 = vld [vmem:[%s1 + $0x18] sm:$0xff]
        %v178 = vld [vmem:[%s1 + $0x20] sm:$0xff]
        %v179 = vld [vmem:[%s1 + $0x28] sm:$0xff]
        %v180 = vld [vmem:[%s1 + $0x30] sm:$0xff]
        %v181 = vld [vmem:[%s1 + $0x38] sm:$0xff]
        %v182 = vld [vmem:[%s1 + $0x40] sm:$0xff]
        %v183 = vld [vmem:[%s1 + $0x48] sm:$0xff]
        %v184 = vld [vmem:[%s1 + $0x50] sm:$0xff]
        %v185 = vld [vmem:[%s1 + $0x58] sm:$0xff]
        %v186 = vld [vmem:[%s1 + $0x60] sm:$0xff]
        %v187 = vld [vmem:[%s1 + $0x68] sm:$0xff]
        %v188 = vld [vmem:[%s1 + $0x70] sm:$0xff]
        %v189 = vld [vmem:[%s1 + $0x78] sm:$0xff]
        %190 = vmatprep.subr.mxu0 0.0
        %191 = vmatpush1.msra.mxu0 %v174
        %192 = vmatprep.subr.mxu0 0.0
        %193 = vmatpush1.msra.mxu0 %v175
        %194 = vmatprep.subr.mxu0 0.0
        %195 = vmatpush1.msra.mxu0 %v176
        %196 = vmatprep.subr.mxu0 0.0
        %197 = vmatpush1.msra.mxu0 %v177
        %198 = vmatprep.subr.mxu0 0.0
        %199 = vmatpush1.msra.mxu0 %v178
        %200 = vmatprep.subr.mxu0 0.0
        %201 = vmatpush1.msra.mxu0 %v179
        %202 = vmatprep.subr.mxu0 0.0
        %203 = vmatpush1.msra.mxu0 %v180
        %204 = vmatprep.subr.mxu0 0.0
        %205 = vmatpush1.msra.mxu0 %v181
        %206 = vmatprep.subr.mxu0 0.0
        %207 = vmatpush1.msra.mxu0 %v182
        %208 = vmatprep.subr.mxu0 0.0
        %209 = vmatpush1.msra.mxu0 %v183
        %210 = vmatprep.subr.mxu0 0.0
        %211 = vmatpush1.msra.mxu0 %v184
        %212 = vmatprep.subr.mxu0 0.0
        %213 = vmatpush1.msra.mxu0 %v185
        %214 = vmatprep.subr.mxu0 0.0
        %215 = vmatpush1.msra.mxu0 %v186
        %216 = vmatprep.subr.mxu0 0.0
        %217 = vmatpush1.msra.mxu0 %v187
        %218 = vmatprep.subr.mxu0 0.0
        %219 = vmatpush1.msra.mxu0 %v188
        %220 = vmatprep.subr.mxu0 0.0
        %221 = vmatpush1.msra.mxu0 %v189
        %222 = vmatprep.subr.mxu0 0.0
        %223 = vmatpush1.msra.mxu0 0.0
        %224 = vmatprep.subr.mxu0 0.0
        %225 = vmatpush1.msra.mxu0 0.0
        %226 = vmatprep.subr.mxu0 0.0
        %227 = vmatpush1.msra.mxu0 0.0
        %228 = vmatprep.subr.mxu0 0.0
        %229 = vmatpush1.msra.mxu0 0.0
        %230 = vmatprep.subr.mxu0 0.0
        %231 = vmatpush1.msra.mxu0 0.0
        %232 = vmatprep.subr.mxu0 0.0
        %233 = vmatpush1.msra.mxu0 0.0
        %234 = vmatprep.subr.mxu0 0.0
        %235 = vmatpush1.msra.mxu0 0.0
        %236 = vmatprep.subr.mxu0 0.0
        %237 = vmatpush1.msra.mxu0 0.0
        %238 = vmatprep.subr.mxu0 0.0
        %239 = vmatpush1.msra.mxu0 0.0
        %240 = vmatprep.subr.mxu0 0.0
        %241 = vmatpush1.msra.mxu0 0.0
        %242 = vmatprep.subr.mxu0 0.0
        %243 = vmatpush1.msra.mxu0 0.0
        %244 = vmatprep.subr.mxu0 0.0
        %245 = vmatpush1.msra.mxu0 0.0
        %246 = vmatprep.subr.mxu0 0.0
        %247 = vmatpush1.msra.mxu0 0.0
        %248 = vmatprep.subr.mxu0 0.0
        %249 = vmatpush1.msra.mxu0 0.0
        %250 = vmatprep.subr.mxu0 0.0
        %251 = vmatpush1.msra.mxu0 0.0
        %252 = vmatprep.subr.mxu0 0.0
        %253 = vmatpush1.msra.mxu0 0.0
        %254 = vmatprep.mubr.f32.mxu0 0.0
        %255 = vmatmul.mubr.f32.gmra.mrb[0].mxu0 %v172
        %v256 = vpop.f32.mrb[0].mxu0
        %v257 = vadd.f32 0.0, %v256
        %v258 = vpop.f32.mrb[0].mxu0
        %259 = vmatprep.mubr.f32.mxu0 0.0
        %260 = vmatmul.mubr.f32.gmra.mrb[0].mxu0 %v173
        %v261 = vpop.f32.mrb[0].mxu0
        %v262 = vadd.f32 0.0, %v261
        %v263 = vpop.f32.mrb[0].mxu0
        %264 = vdwg.mxu0
        %v265 = vmax.f32 %v257, 0.0
        %v266 = vmax.f32 %v262, 0.0
        %v267 = vld [vmem:[%s2] sm:$0xff]
        %v268 = vld [vmem:[%s2 + $0x8] sm:$0xff]
        %v269 = vld [vmem:[%s2 + $0x10] sm:$0xff]
        %v270 = vld [vmem:[%s2 + $0x18] sm:$0xff]
        %vm271 = vcmask 261120
        %v273 = vsel %vm271, %v265, 0
        %v276 = vsel %vm271, %v266, 0
        %278 = vmatprep.subr.mxu0 0.0
        %279 = vmatpush1.msra.mxu0 %v267
        %280 = vmatprep.subr.mxu0 0.0
        %281 = vmatpush1.msra.mxu0 %v268
        %282 = vmatprep.subr.mxu0 0.0
        %283 = vmatpush1.msra.mxu0 %v269
        %284 = vmatprep.subr.mxu0 0.0
        %285 = vmatpush1.msra.mxu0 %v270
        %286 = vmatprep.subr.mxu0 0.0
        %287 = vmatpush1.msra.mxu0 0.0
        %288 = vmatprep.subr.mxu0 0.0
        %289 = vmatpush1.msra.mxu0 0.0
        %290 = vmatprep.subr.mxu0 0.0
        %291 = vmatpush1.msra.mxu0 0.0
        %292 = vmatprep.subr.mxu0 0.0
        %293 = vmatpush1.msra.mxu0 0.0
        %294 = vmatprep.subr.mxu0 0.0
        %295 = vmatpush1.msra.mxu0 0.0
        %296 = vmatprep.subr.mxu0 0.0
        %297 = vmatpush1.msra.mxu0 0.0
        %298 = vmatprep.subr.mxu0 0.0
        %299 = vmatpush1.msra.mxu0 0.0
        %300 = vmatprep.subr.mxu0 0.0
        %301 = vmatpush1.msra.mxu0 0.0
        %302 = vmatprep.subr.mxu0 0.0
        %303 = vmatpush1.msra.mxu0 0.0
        %304 = vmatprep.subr.mxu0 0.0
        %305 = vmatpush1.msra.mxu0 0.0
        %306 = vmatprep.subr.mxu0 0.0
        %307 = vmatpush1.msra.mxu0 0.0
        %308 = vmatprep.subr.mxu0 0.0
        %309 = vmatpush1.msra.mxu0 0.0
        %310 = vmatprep.subr.mxu0 0.0
        %311 = vmatpush1.msra.mxu0 0.0
        %312 = vmatprep.subr.mxu0 0.0
        %313 = vmatpush1.msra.mxu0 0.0
        %314 = vmatprep.subr.mxu0 0.0
        %315 = vmatpush1.msra.mxu0 0.0
        %316 = vmatprep.subr.mxu0 0.0
        %317 = vmatpush1.msra.mxu0 0.0
        %318 = vmatprep.subr.mxu0 0.0
        %319 = vmatpush1.msra.mxu0 0.0
        %320 = vmatprep.subr.mxu0 0.0
        %321 = vmatpush1.msra.mxu0 0.0
        %322 = vmatprep.subr.mxu0 0.0
        %323 = vmatpush1.msra.mxu0 0.0
        %324 = vmatprep.subr.mxu0 0.0
        %325 = vmatpush1.msra.mxu0 0.0
        %326 = vmatprep.subr.mxu0 0.0
        %327 = vmatpush1.msra.mxu0 0.0
        %328 = vmatprep.subr.mxu0 0.0
        %329 = vmatpush1.msra.mxu0 0.0
        %330 = vmatprep.subr.mxu0 0.0
        %331 = vmatpush1.msra.mxu0 0.0
        %332 = vmatprep.subr.mxu0 0.0
        %333 = vmatpush1.msra.mxu0 0.0
        %334 = vmatprep.subr.mxu0 0.0
        %335 = vmatpush1.msra.mxu0 0.0
        %336 = vmatprep.subr.mxu0 0.0
        %337 = vmatpush1.msra.mxu0 0.0
        %338 = vmatprep.subr.mxu0 0.0
        %339 = vmatpush1.msra.mxu0 0.0
        %340 = vmatprep.subr.mxu0 0.0
        %341 = vmatpush1.msra.mxu0 0.0
        %342 = vmatprep.mubr.f32.mxu0 0.0
        %343 = vmatmul.mubr.f32.gmra.mrb[0].mxu0 %v273
        %v344 = vpop.f32.mrb[0].mxu0
        %v345 = vadd.f32 0.0, %v344
        %v346 = vpop.f32.mrb[0].mxu0
        %347 = vmatprep.mubr.f32.mxu0 0.0
        %348 = vmatmul.mubr.f32.gmra.mrb[0].mxu0 %v276
        %v349 = vpop.f32.mrb[0].mxu0
        %v350 = vadd.f32 0.0, %v349
        %v351 = vpop.f32.mrb[0].mxu0
        %352 = vdwg.mxu0
        %v353 = vmax.f32 %v345, 0.0
        %v354 = vmax.f32 %v350, 0.0
        %355 = vst [vmem:[%s164] sm:$0xff] %v353
        %356 = vst [vmem:[%s164 + $0x8] sm:$0xff] %v354
        %s357 = sand.u32 %s93, 1
        %s358 = scalar_lea.sflag [#allocation3], %s357
        %s359 = sand.u32 %s93, 1
        %s360 = smul.addr %s359, 16
        %s361 = scalar_lea.vmem [#allocation2], %s360
        // Predicated region
        $region33: #{tpu_custom_call.1} parent=31 // pred_check
          %p362 = pneg %p103
        $region34: #{tpu_custom_call.1} parent=31 // pred_check_branch
          %364 = sbr.rel (%p362) target = $region36
        $region35: #{tpu_custom_call.1} parent=31 // pred_region
          %s365 = smul.u32 2, %s17
          %s367 = ssub.s32 256, 256
          %368 = vsyncadd %s358, %s367
          %s369 = smul.addr %s365, 128
          %s370 = scalar_lea.hbm %s3, %s369
          %s371 = sshll.u32 %s361, 4
          %s372 = int_to_ptr.vmem [resolvable:$true] %s371
          %377 = dma.vmem_to_hbm [thread:$0]  %s372, 256, %s370, %s358, 128, 128, 8
        $region36: #{tpu_custom_call.1} parent=31 // pred_fallthru
          _
      $region32: #{tpu_custom_call.1} parent=5 // pred_fallthru
        _
      %p378 = scmp.le.s32.totalorder 2, %s12
      // Predicated region
      $region37: #{tpu_custom_call.1} parent=5 // pred_check
        %p379 = pneg %p378
      $region38: #{tpu_custom_call.1} parent=5 // pred_check_branch
        %381 = sbr.rel (%p379) target = $region40
      $region39: #{tpu_custom_call.1} parent=5 // pred_region
        %s382 = ssub.s32 %s12, 2
        // Predicated region
        $region41: #{tpu_custom_call.1} parent=39 // pred_check
          %p383 = pneg %p109
        $region42: #{tpu_custom_call.1} parent=39 // pred_check_branch
          %385 = sbr.rel (%p383) target = $region44
        $region43: #{tpu_custom_call.1} parent=39 // pred_region
          %s386 = sand.u32 %s94, 1
          %s387 = scalar_lea.sflag [#allocation3], %s386
          %s388 = sand.u32 %s94, 1
          %s389 = smul.addr %s388, 16
          %s390 = scalar_lea.vmem [#allocation2], %s389
          %391 = dma.done %s387, 256
        $region44: #{tpu_custom_call.1} parent=39 // pred_fallthru
          _
      $region40: #{tpu_custom_call.1} parent=5 // pred_fallthru
        _
    $region6: #{tpu_custom_call.1} parent=1 // loop_footer
      %s16 = sadd.s32 1, %s12
    $region7: #{tpu_custom_call.1} parent=1 // loop_footer_branch
      %11 = sbr.rel target = $region3
    $region8: #{tpu_custom_call.1} parent=1 // loop_exit
      _
    %392 = vsyncpa [#allocation3], 1
    %s393 = scalar_lea.sflag [#allocation3], 1
    %394 = vsyncpa %s393, 1

</llo_original>
